<compile_context>
chip_gen: v7x
topology: tpu7x:2x2x1
jax: 0.10.0
libtpu: 0.0.40
codegen_flags: <defaults>
</compile_context>

<pallas_src>
import functools

import jax
import jax.numpy as jnp
from jax import lax
from jax.experimental import pallas as pl
from jax.experimental.pallas import tpu as pltpu


def _round_up(x, m):
    return ((x + m - 1) // m) * m


def _lora_linear_kernel(x_ref, w_ref, a_ref, b_ref, o_ref, acc_ref, down_ref,
                        *, scaling):
    # x_ref   : (tm, tk)            w_ref  : (tn, tk)   (W block, un-transposed)
    # a_ref   : (r,  tk)            b_ref  : (tn, r)
    # o_ref   : (tm, tn)            acc_ref: (tm, tn) f32   down_ref: (tm, r) f32
    k = pl.program_id(2)
    nk = pl.num_programs(2)

    @pl.when(k == 0)
    def _():
        acc_ref[...] = jnp.zeros_like(acc_ref)
        down_ref[...] = jnp.zeros_like(down_ref)

    x = x_ref[...]
    # Base GEMM: contract x (tm, tk) with W block (tn, tk) on their K axes.
    acc_ref[...] += lax.dot_general(
        x, w_ref[...],
        dimension_numbers=(((1,), (1,)), ((), ())),
        preferred_element_type=jnp.float32)
    # LoRA down-projection shares the same k loop (negligible extra FLOPs).
    down_ref[...] += lax.dot_general(
        x, a_ref[...],
        dimension_numbers=(((1,), (1,)), ((), ())),
        preferred_element_type=jnp.float32)

    @pl.when(k == nk - 1)
    def _():
        # Scale the small (tm, r) tensor, keep it in f32 (no precision drop).
        down = down_ref[...] * jnp.float32(scaling)
        up = lax.dot_general(
            down, b_ref[...].astype(jnp.float32),
            dimension_numbers=(((1,), (1,)), ((), ())),
            preferred_element_type=jnp.float32)
        o_ref[...] = (acc_ref[...] + up).astype(o_ref.dtype)


def _linear_kernel(x_ref, w_ref, o_ref, acc_ref):
    # r == 0 path: plain tiled y = x @ W^T.
    k = pl.program_id(2)

    @pl.when(k == 0)
    def _():
        acc_ref[...] = jnp.zeros_like(acc_ref)

    acc_ref[...] += lax.dot_general(
        x_ref[...], w_ref[...],
        dimension_numbers=(((1,), (1,)), ((), ())),
        preferred_element_type=jnp.float32)

    @pl.when(k == pl.num_programs(2) - 1)
    def _():
        o_ref[...] = acc_ref[...].astype(o_ref.dtype)


def lora_linear_pallas(x, weight, lora_down_w=None, lora_up_w=None, *,
                       r=4, alpha=1.0, tm=512, tn=512, tk=512,
                       vmem_limit_bytes=32 * 1024 * 1024):
    """x: (..., in_features); weight: (out, in); lora_down_w: (r, in);
    lora_up_w: (out, r).  Returns (..., out_features)."""
    N, K = weight.shape
    lead = x.shape[:-1]
    x2d = x.reshape(-1, K)
    M = x2d.shape[0]

    has_lora = r is not None and r > 0
    scaling = float(alpha) / float(r) if has_lora else 0.0

    # Clamp tiles to the (sublane/lane-rounded) problem dims so tiny shapes are
    # legal; keep them (8, 128)-aligned so every block satisfies TPU tiling.
    tm = min(tm, _round_up(M, 8))
    tn = min(tn, _round_up(N, 128))
    tk = min(tk, _round_up(K, 128))
    Mp, Np, Kp = _round_up(M, tm), _round_up(N, tn), _round_up(K, tk)

    # Zero-pad only when needed (no-op for aligned production shapes).
    xp = x2d if (Mp, Kp) == (M, K) else jnp.pad(x2d, ((0, Mp - M), (0, Kp - K)))
    wp = weight if (Np, Kp) == (N, K) else jnp.pad(weight,
                                                   ((0, Np - N), (0, Kp - K)))

    grid = (Mp // tm, Np // tn, Kp // tk)

    in_specs = [
        pl.BlockSpec((tm, tk), lambda i, j, k: (i, k)),   # x
        pl.BlockSpec((tn, tk), lambda i, j, k: (j, k)),   # W (un-transposed)
    ]
    operands = [xp, wp]
    scratch_shapes = [pltpu.VMEM((tm, tn), jnp.float32)]  # base accumulator

    if has_lora:
        ap = (lora_down_w if Kp == K
              else jnp.pad(lora_down_w, ((0, 0), (0, Kp - K))))
        bp = (lora_up_w if Np == N
              else jnp.pad(lora_up_w, ((0, Np - N), (0, 0))))
        in_specs += [
            pl.BlockSpec((r, tk), lambda i, j, k: (0, k)),   # A (un-transposed)
            pl.BlockSpec((tn, r), lambda i, j, k: (j, 0)),   # B (un-transposed)
        ]
        operands += [ap, bp]
        scratch_shapes += [pltpu.VMEM((tm, r), jnp.float32)]  # down accumulator
        kernel = functools.partial(_lora_linear_kernel, scaling=scaling)
    else:
        kernel = _linear_kernel

    out_dtype = x.dtype
    itemsize = jnp.dtype(out_dtype).itemsize
    flops = 2 * M * N * K + (2 * M * K * r + 2 * M * r * N if has_lora else 0)
    bytes_accessed = (sum(int(a.size) * int(a.dtype.itemsize) for a in operands)
                      + M * N * itemsize)
    cost = pl.CostEstimate(flops=flops, transcendentals=0,
                           bytes_accessed=bytes_accessed)

    outp = pl.pallas_call(
        kernel,
        out_shape=jax.ShapeDtypeStruct((Mp, Np), out_dtype),
        grid=grid,
        in_specs=in_specs,
        out_specs=pl.BlockSpec((tm, tn), lambda i, j, k: (i, j)),
        scratch_shapes=scratch_shapes,
        compiler_params=pltpu.CompilerParams(
            dimension_semantics=("parallel", "parallel", "arbitrary"),
            vmem_limit_bytes=vmem_limit_bytes),
        cost_estimate=cost,
    )(*operands)

    out2d = outp if (Mp, Np) == (M, N) else outp[:M, :N]
    return out2d.reshape(*lead, N)


def lora_linear_ref(x, weight, lora_down_w=None, lora_up_w=None, *,
                    r=4, alpha=1.0):
    y = jnp.einsum("...k,nk->...n", x, weight)
    if r is not None and r > 0:
        scaling = alpha / r
        y = y + jnp.einsum("...r,nr->...n",
                           jnp.einsum("...k,rk->...r", x, lora_down_w),
                           lora_up_w) * scaling
    return y


if __name__ == "__main__":
    # Small shapes consistent with the module: batch=2, seq=8, hidden=32 -> 64.
    batch, seq = 2, 8
    in_features, out_features, r, alpha = 32, 64, 4, 1.0

    key = jax.random.PRNGKey(0)
    kx, kw, ka, kb = jax.random.split(key, 4)

    x = jax.random.normal(kx, (batch, seq, in_features), dtype=jnp.float32)
    weight = jax.random.normal(kw, (out_features, in_features),
                               dtype=jnp.float32) * 0.02
    lora_down_w = jax.random.normal(ka, (r, in_features), dtype=jnp.float32) * 0.1
    lora_up_w = jax.random.normal(kb, (out_features, r), dtype=jnp.float32) * 0.1

    # LoRA path (r > 0).
    out = lora_linear_pallas(x, weight, lora_down_w, lora_up_w, r=r, alpha=alpha)
    out = jax.block_until_ready(out)
    ref = lora_linear_ref(x, weight, lora_down_w, lora_up_w, r=r, alpha=alpha)
    assert out.shape == (batch, seq, out_features)
    assert jnp.allclose(out, ref, atol=1e-5, rtol=1e-5)

    # Base-only path (r == 0).
    out0 = lora_linear_pallas(x, weight, r=0, alpha=alpha)
    out0 = jax.block_until_ready(out0)
    ref0 = lora_linear_ref(x, weight, r=0, alpha=alpha)
    assert jnp.allclose(out0, ref0, atol=1e-5, rtol=1e-5)

    print("KERNEL_OK")
</pallas_src>

<mosaic_0001>
module attributes {stable_mosaic.version = 11 : i64} {
  func.func @_lora_linear_kernel(%arg0: i32, %arg1: i32, %arg2: i32, %arg3: memref<16x128xf32, #tpu.memory_space<vmem>>, %arg4: memref<128x128xf32, #tpu.memory_space<vmem>>, %arg5: memref<4x128xf32, #tpu.memory_space<vmem>>, %arg6: memref<128x4xf32, #tpu.memory_space<vmem>>, %arg7: memref<16x128xf32, #tpu.memory_space<vmem>>, %arg8: memref<16x128xf32, #tpu.memory_space<vmem>>, %arg9: memref<16x4xf32, #tpu.memory_space<vmem>>) attributes {dimension_semantics = [#tpu.dimension_semantics<parallel>, #tpu.dimension_semantics<parallel>, #tpu.dimension_semantics<arbitrary>], iteration_bounds = array<i64: 1, 1, 1>, scalar_prefetch = 0 : i64, scratch_operands = 2 : i64, tpu.core_type = #tpu.core_type<tc>, window_params = [{transform_indices = @transform_0, window_bounds = array<i64: 16, 128>}, {transform_indices = @transform_1, window_bounds = array<i64: 128, 128>}, {transform_indices = @transform_2, window_bounds = array<i64: 4, 128>}, {transform_indices = @transform_3, window_bounds = array<i64: 128, 4>}, {transform_indices = @transform_4, window_bounds = array<i64: 16, 128>}]} {
    %c0_i32 = arith.constant 0 : i32
    %0 = arith.cmpi eq, %arg2, %c0_i32 : i32
    %1 = arith.extui %0 : i1 to i32
    %c0_i32_0 = arith.constant 0 : i32
    %2 = arith.cmpi ne, %1, %c0_i32_0 : i32
    scf.if %2 {
      %cst_17 = arith.constant 0.000000e+00 : f32
      %17 = vector.broadcast %cst_17 : f32 to vector<16x128xf32>
      %c0_18 = arith.constant 0 : index
      %c0_19 = arith.constant 0 : index
      %18 = vector.load %arg8[%c0_18, %c0_19] : memref<16x128xf32, #tpu.memory_space<vmem>>, vector<16x128xf32>
      tpu.vector_store %arg8[%c0_18, %c0_19], %17 {strides = array<i32>} : memref<16x128xf32, #tpu.memory_space<vmem>>, vector<16x128xf32>,
      %cst_20 = arith.constant 0.000000e+00 : f32
      %19 = vector.broadcast %cst_20 : f32 to vector<16x4xf32>
      %c0_21 = arith.constant 0 : index
      %c0_22 = arith.constant 0 : index
      %20 = vector.load %arg9[%c0_21, %c0_22] : memref<16x4xf32, #tpu.memory_space<vmem>>, vector<16x4xf32>
      tpu.vector_store %arg9[%c0_21, %c0_22], %19 {strides = array<i32>} : memref<16x4xf32, #tpu.memory_space<vmem>>, vector<16x4xf32>,
    } else {
    }
    %c0 = arith.constant 0 : index
    %c0_1 = arith.constant 0 : index
    %3 = vector.load %arg3[%c0, %c0_1] : memref<16x128xf32, #tpu.memory_space<vmem>>, vector<16x128xf32>
    %c0_2 = arith.constant 0 : index
    %c0_3 = arith.constant 0 : index
    %4 = vector.load %arg8[%c0_2, %c0_3] : memref<16x128xf32, #tpu.memory_space<vmem>>, vector<16x128xf32>
    %c0_4 = arith.constant 0 : index
    %c0_5 = arith.constant 0 : index
    %5 = vector.load %arg4[%c0_4, %c0_5] : memref<128x128xf32, #tpu.memory_space<vmem>>, vector<128x128xf32>
    %cst = arith.constant dense<0.000000e+00> : vector<16x128xf32>
    %6 = tpu.matmul %3, %5, %cst {dimension_numbers = #tpu.dot_dimension_numbers<[1], [1], [0], [0], [0, 0, 1, 0], [], []>} : vector<16x128xf32>, vector<128x128xf32>, vector<16x128xf32> -> vector<16x128xf32>
    %7 = arith.addf %4, %6 : vector<16x128xf32>
    %c0_6 = arith.constant 0 : index
    %c0_7 = arith.constant 0 : index
    %8 = vector.load %arg8[%c0_6, %c0_7] : memref<16x128xf32, #tpu.memory_space<vmem>>, vector<16x128xf32>
    tpu.vector_store %arg8[%c0_6, %c0_7], %7 {strides = array<i32>} : memref<16x128xf32, #tpu.memory_space<vmem>>, vector<16x128xf32>,
    %c0_8 = arith.constant 0 : index
    %c0_9 = arith.constant 0 : index
    %9 = vector.load %arg9[%c0_8, %c0_9] : memref<16x4xf32, #tpu.memory_space<vmem>>, vector<16x4xf32>
    %c0_10 = arith.constant 0 : index
    %c0_11 = arith.constant 0 : index
    %10 = vector.load %arg5[%c0_10, %c0_11] : memref<4x128xf32, #tpu.memory_space<vmem>>, vector<4x128xf32>
    %cst_12 = arith.constant dense<0.000000e+00> : vector<16x4xf32>
    %11 = tpu.matmul %3, %10, %cst_12 {dimension_numbers = #tpu.dot_dimension_numbers<[1], [1], [0], [0], [0, 0, 1, 0], [], []>} : vector<16x128xf32>, vector<4x128xf32>, vector<16x4xf32> -> vector<16x4xf32>
    %12 = arith.addf %9, %11 : vector<16x4xf32>
    %c0_13 = arith.constant 0 : index
    %c0_14 = arith.constant 0 : index
    %13 = vector.load %arg9[%c0_13, %c0_14] : memref<16x4xf32, #tpu.memory_space<vmem>>, vector<16x4xf32>
    tpu.vector_store %arg9[%c0_13, %c0_14], %12 {strides = array<i32>} : memref<16x4xf32, #tpu.memory_space<vmem>>, vector<16x4xf32>,
    %c0_i32_15 = arith.constant 0 : i32
    %14 = arith.cmpi eq, %arg2, %c0_i32_15 : i32
    %15 = arith.extui %14 : i1 to i32
    %c0_i32_16 = arith.constant 0 : i32
    %16 = arith.cmpi ne, %15, %c0_i32_16 : i32
    scf.if %16 {
      %c0_17 = arith.constant 0 : index
      %c0_18 = arith.constant 0 : index
      %17 = vector.load %arg9[%c0_17, %c0_18] : memref<16x4xf32, #tpu.memory_space<vmem>>, vector<16x4xf32>
      %cst_19 = arith.constant 2.500000e-01 : f32
      %18 = vector.broadcast %cst_19 : f32 to vector<16x4xf32>
      %19 = arith.mulf %17, %18 : vector<16x4xf32>
      %c0_20 = arith.constant 0 : index
      %c0_21 = arith.constant 0 : index
      %20 = vector.load %arg6[%c0_20, %c0_21] : memref<128x4xf32, #tpu.memory_space<vmem>>, vector<128x4xf32>
      %cst_22 = arith.constant dense<0.000000e+00> : vector<16x128xf32>
      %21 = tpu.matmul %19, %20, %cst_22 {dimension_numbers = #tpu.dot_dimension_numbers<[1], [1], [0], [0], [0, 0, 1, 0], [], []>} : vector<16x4xf32>, vector<128x4xf32>, vector<16x128xf32> -> vector<16x128xf32>
      %c0_23 = arith.constant 0 : index
      %c0_24 = arith.constant 0 : index
      %22 = vector.load %arg8[%c0_23, %c0_24] : memref<16x128xf32, #tpu.memory_space<vmem>>, vector<16x128xf32>
      %23 = arith.addf %22, %21 : vector<16x128xf32>
      %c0_25 = arith.constant 0 : index
      %c0_26 = arith.constant 0 : index
      %24 = vector.load %arg7[%c0_25, %c0_26] : memref<16x128xf32, #tpu.memory_space<vmem>>, vector<16x128xf32>
      tpu.vector_store %arg7[%c0_25, %c0_26], %23 {strides = array<i32>} : memref<16x128xf32, #tpu.memory_space<vmem>>, vector<16x128xf32>,
    } else {
    }
    return
  }
  func.func @transform_0(%arg0: i32, %arg1: i32, %arg2: i32) -> (i32, i32) {
    %c0_i32 = arith.constant 0 : i32
    return %arg0, %arg2 : i32, i32
  }
  func.func @transform_1(%arg0: i32, %arg1: i32, %arg2: i32) -> (i32, i32) {
    %c0_i32 = arith.constant 0 : i32
    return %arg1, %arg2 : i32, i32
  }
  func.func @transform_2(%arg0: i32, %arg1: i32, %arg2: i32) -> (i32, i32) {
    %c0_i32 = arith.constant 0 : i32
    %c0_i32_0 = arith.constant 0 : i32
    return %c0_i32, %arg2 : i32, i32
  }
  func.func @transform_3(%arg0: i32, %arg1: i32, %arg2: i32) -> (i32, i32) {
    %c0_i32 = arith.constant 0 : i32
    %c0_i32_0 = arith.constant 0 : i32
    return %arg1, %c0_i32 : i32, i32
  }
  func.func @transform_4(%arg0: i32, %arg1: i32, %arg2: i32) -> (i32, i32) {
    %c0_i32 = arith.constant 0 : i32
    return %arg0, %arg1 : i32, i32
  }
}

</mosaic_0001>

<llo_original>
// kernel: tpu_custom_call.1
$region0: #{tpu_custom_call.1}
  #allocation0 [shape = 'u32[]', space=smem, size = 0x4, offset = 0x4, fixed_abs, tag = 'smem constant byte address 0x4 - core index']
  #allocation1 [shape = 'u32[144,128]{1,0:T(1,128)}', space=vmem, size = 0x12000, scoped, tag = 'internal scratch']
  #allocation2 [shape = 'f32[16,128]{1,0:T(8,128)}', space=vmem, size = 0x2000, scoped, tag = 'scratch operand']
  #allocation3 [shape = 'f32[16,4]{1,0:T(8,128)}', space=vmem, size = 0x2000, scoped, tag = 'scratch operand']
  %s0 = inlined_call_operand.hbm [shape: f32[16,128], index: 0, kind: input, shape index: {}]
  %s1 = inlined_call_operand.vmem [shape: f32[128,128], index: 1, kind: input, shape index: {}]
  %s2 = inlined_call_operand.vmem [shape: f32[4,128], index: 2, kind: input, shape index: {}]
  %s3 = inlined_call_operand.vmem [shape: f32[128,4], index: 3, kind: input, shape index: {}]
  %s4 = inlined_call_operand.hbm [shape: f32[16,128], index: 4, kind: output, shape index: {}]
  %s5 = sld [smem:[#allocation0]]
  $region38: #{tpu_custom_call.1} parent=0
    _
  %s7 = ssub.s32 1, %s5
  %s8 = scalar_select 0, %s7, %s5
  $region1: #{tpu_custom_call.1} parent=0
    #allocation4 [shape = 'u8[8192]{0}', space=vmem, size = 0x2000, scoped, tag = 'input window, operand 0, single buffered']
    #allocation5 [shape = 's32[1]{0}', space=sflag, size = 0x4, scoped, tag = 'scoped memory for tpu_custom_call.1']
    #allocation6 [shape = 's32[1]{0}', space=sflag, size = 0x4, scoped, tag = 'scoped memory for tpu_custom_call.1']
    #allocation7 [shape = 'u8[8192]{0}', space=vmem, size = 0x2000, scoped, tag = 'output window, operand 0, single buffered']
    %9 = vsyncpa [#allocation5], 0
    %10 = vsyncpa [#allocation6], 0
    // Predicated region
    $region2: #{tpu_custom_call.1} parent=1 // pred_check
      _
    $region3: #{tpu_custom_call.1} parent=1 // pred_check_branch
      %12 = sbr.rel (0) target = $region5
    $region4: #{tpu_custom_call.1} parent=1 // pred_region
      %s14 = ssub.s32 256, 256
      %15 = vsyncadd [#allocation5], %s14
      %s16 = sshll.u32 [#allocation4], 4
      %s17 = int_to_ptr.vmem [resolvable:$true] %s16
      %22 = dma.hbm_to_vmem [thread:$0]  %s0, 256, %s17, [#allocation5], 128, 128, 8
    $region5: #{tpu_custom_call.1} parent=1 // pred_fallthru
      _
    // Predicated region
    $region6: #{tpu_custom_call.1} parent=1 // pred_check
      _
    $region7: #{tpu_custom_call.1} parent=1 // pred_check_branch
      %24 = sbr.rel (0) target = $region9
    $region8: #{tpu_custom_call.1} parent=1 // pred_region
      _
    $region9: #{tpu_custom_call.1} parent=1 // pred_fallthru
      _
    // Predicated region
    $region10: #{tpu_custom_call.1} parent=1 // pred_check
      _
    $region11: #{tpu_custom_call.1} parent=1 // pred_check_branch
      %26 = sbr.rel (0) target = $region13
    $region12: #{tpu_custom_call.1} parent=1 // pred_region
      _
    $region13: #{tpu_custom_call.1} parent=1 // pred_fallthru
      _
    // Predicated region
    $region14: #{tpu_custom_call.1} parent=1 // pred_check
      _
    $region15: #{tpu_custom_call.1} parent=1 // pred_check_branch
      %28 = sbr.rel (0) target = $region17
    $region16: #{tpu_custom_call.1} parent=1 // pred_region
      _
    $region17: #{tpu_custom_call.1} parent=1 // pred_fallthru
      _
    // Predicated region
    $region18: #{tpu_custom_call.1} parent=1 // pred_check
      _
    $region19: #{tpu_custom_call.1} parent=1 // pred_check_branch
      %30 = sbr.rel (0) target = $region21
    $region20: #{tpu_custom_call.1} parent=1 // pred_region
      %31 = dma.done [#allocation5], 256
    $region21: #{tpu_custom_call.1} parent=1 // pred_fallthru
      _
    %p32 = scmp.eq.s32.totalorder 0, 0
    // Predicated region
    $region22: #{tpu_custom_call.1} parent=1 // pred_check
      %p33 = pneg %p32
    $region23: #{tpu_custom_call.1} parent=1 // pred_check_branch
      %35 = sbr.rel (%p33) target = $region25
    $region24: #{tpu_custom_call.1} parent=1 // pred_region
      %36 = vst [vmem:[#allocation2] sm:$0xff] 0.0
      %37 = vst [vmem:[#allocation2 + $0x8] sm:$0xff] 0.0
      %vm38 = vcmask 31744
      %39 = vst.msk [vmem:[#allocation3] sm:$0xff] %vm38, 0.0
      %40 = vst.msk [vmem:[#allocation3 + $0x8] sm:$0xff] %vm38, 0.0
    $region25: #{tpu_custom_call.1} parent=1 // pred_fallthru
      _
    %v41 = vld [vmem:[#allocation4] sm:$0xff]
    %v42 = vld [vmem:[#allocation4 + $0x8] sm:$0xff]
    %v43 = vld [vmem:[#allocation2] sm:$0xff]
    %v44 = vld [vmem:[#allocation2 + $0x8] sm:$0xff]
    %v45 = vld [vmem:[%s1] sm:$0xff]
    %v46 = vld [vmem:[%s1 + $0x8] sm:$0xff]
    %v47 = vld [vmem:[%s1 + $0x10] sm:$0xff]
    %v48 = vld [vmem:[%s1 + $0x18] sm:$0xff]
    %v49 = vld [vmem:[%s1 + $0x20] sm:$0xff]
    %v50 = vld [vmem:[%s1 + $0x28] sm:$0xff]
    %v51 = vld [vmem:[%s1 + $0x30] sm:$0xff]
    %v52 = vld [vmem:[%s1 + $0x38] sm:$0xff]
    %v53 = vld [vmem:[%s1 + $0x40] sm:$0xff]
    %v54 = vld [vmem:[%s1 + $0x48] sm:$0xff]
    %v55 = vld [vmem:[%s1 + $0x50] sm:$0xff]
    %v56 = vld [vmem:[%s1 + $0x58] sm:$0xff]
    %v57 = vld [vmem:[%s1 + $0x60] sm:$0xff]
    %v58 = vld [vmem:[%s1 + $0x68] sm:$0xff]
    %v59 = vld [vmem:[%s1 + $0x70] sm:$0xff]
    %v60 = vld [vmem:[%s1 + $0x78] sm:$0xff]
    %61 = vmatprep.subr.mxu0 0.0
    %62 = vmatpush1.xpose.msra.mxu0 %v45
    %63 = vmatprep.subr.mxu0 0.0
    %64 = vmatpush1.xpose.msra.mxu0 %v46
    %65 = vmatprep.subr.mxu0 0.0
    %66 = vmatpush1.xpose.msra.mxu0 %v47
    %67 = vmatprep.subr.mxu0 0.0
    %68 = vmatpush1.xpose.msra.mxu0 %v48
    %69 = vmatprep.subr.mxu0 0.0
    %70 = vmatpush1.xpose.msra.mxu0 %v49
    %71 = vmatprep.subr.mxu0 0.0
    %72 = vmatpush1.xpose.msra.mxu0 %v50
    %73 = vmatprep.subr.mxu0 0.0
    %74 = vmatpush1.xpose.msra.mxu0 %v51
    %75 = vmatprep.subr.mxu0 0.0
    %76 = vmatpush1.xpose.msra.mxu0 %v52
    %77 = vmatprep.subr.mxu0 0.0
    %78 = vmatpush1.xpose.msra.mxu0 %v53
    %79 = vmatprep.subr.mxu0 0.0
    %80 = vmatpush1.xpose.msra.mxu0 %v54
    %81 = vmatprep.subr.mxu0 0.0
    %82 = vmatpush1.xpose.msra.mxu0 %v55
    %83 = vmatprep.subr.mxu0 0.0
    %84 = vmatpush1.xpose.msra.mxu0 %v56
    %85 = vmatprep.subr.mxu0 0.0
    %86 = vmatpush1.xpose.msra.mxu0 %v57
    %87 = vmatprep.subr.mxu0 0.0
    %88 = vmatpush1.xpose.msra.mxu0 %v58
    %89 = vmatprep.subr.mxu0 0.0
    %90 = vmatpush1.xpose.msra.mxu0 %v59
    %91 = vmatprep.subr.mxu0 0.0
    %92 = vmatpush1.xpose.msra.mxu0 %v60
    %93 = vmatprep.subr.mxu0 0.0
    %94 = vmatpush1.xpose.msra.mxu0 0.0
    %95 = vmatprep.subr.mxu0 0.0
    %96 = vmatpush1.xpose.msra.mxu0 0.0
    %97 = vmatprep.subr.mxu0 0.0
    %98 = vmatpush1.xpose.msra.mxu0 0.0
    %99 = vmatprep.subr.mxu0 0.0
    %100 = vmatpush1.xpose.msra.mxu0 0.0
    %101 = vmatprep.subr.mxu0 0.0
    %102 = vmatpush1.xpose.msra.mxu0 0.0
    %103 = vmatprep.subr.mxu0 0.0
    %104 = vmatpush1.xpose.msra.mxu0 0.0
    %105 = vmatprep.subr.mxu0 0.0
    %106 = vmatpush1.xpose.msra.mxu0 0.0
    %107 = vmatprep.subr.mxu0 0.0
    %108 = vmatpush1.xpose.msra.mxu0 0.0
    %109 = vmatprep.subr.mxu0 0.0
    %110 = vmatpush1.xpose.msra.mxu0 0.0
    %111 = vmatprep.subr.mxu0 0.0
    %112 = vmatpush1.xpose.msra.mxu0 0.0
    %113 = vmatprep.subr.mxu0 0.0
    %114 = vmatpush1.xpose.msra.mxu0 0.0
    %115 = vmatprep.subr.mxu0 0.0
    %116 = vmatpush1.xpose.msra.mxu0 0.0
    %117 = vmatprep.subr.mxu0 0.0
    %118 = vmatpush1.xpose.msra.mxu0 0.0
    %119 = vmatprep.subr.mxu0 0.0
    %120 = vmatpush1.xpose.msra.mxu0 0.0
    %121 = vmatprep.subr.mxu0 0.0
    %122 = vmatpush1.xpose.msra.mxu0 0.0
    %123 = vmatprep.subr.mxu0 0.0
    %124 = vmatpush1.xpose.msra.mxu0 0.0
    %125 = vmatprep.mubr.f32.mxu0 0.0
    %126 = vmatmul.mubr.f32.gmra.mrb[0].mxu0 %v41
    %v127 = vpop.f32.mrb[0].mxu0
    %v128 = vadd.f32 0.0, %v127
    %v129 = vpop.f32.mrb[0].mxu0
    %130 = vmatprep.mubr.f32.mxu0 0.0
    %131 = vmatmul.mubr.f32.gmra.mrb[0].mxu0 %v42
    %v132 = vpop.f32.mrb[0].mxu0
    %v133 = vadd.f32 0.0, %v132
    %v134 = vpop.f32.mrb[0].mxu0
    %135 = vdwg.mxu0
    %v136 = vadd.f32 %v43, %v128
    %v137 = vadd.f32 %v44, %v133
    %138 = vst [vmem:[#allocation2] sm:$0xff] %v136
    %139 = vst [vmem:[#allocation2 + $0x8] sm:$0xff] %v137
    %v140 = vld [vmem:[#allocation3] sm:$0xff]
    %v141 = vld [vmem:[#allocation3 + $0x8] sm:$0xff]
    %v142 = vld [vmem:[%s2] sm:$0xf]
    %143 = vmatprep.subr.mxu0 0.0
    %144 = vmatpush1.xpose.msra.mxu0 %v142
    %145 = vmatprep.subr.mxu0 0.0
    %146 = vmatpush1.xpose.msra.mxu0 0.0
    %147 = vmatprep.subr.mxu0 0.0
    %148 = vmatpush1.xpose.msra.mxu0 0.0
    %149 = vmatprep.subr.mxu0 0.0
    %150 = vmatpush1.xpose.msra.mxu0 0.0
    %151 = vmatprep.subr.mxu0 0.0
    %152 = vmatpush1.xpose.msra.mxu0 0.0
    %153 = vmatprep.subr.mxu0 0.0
    %154 = vmatpush1.xpose.msra.mxu0 0.0
    %155 = vmatprep.subr.mxu0 0.0
    %156 = vmatpush1.xpose.msra.mxu0 0.0
    %157 = vmatprep.subr.mxu0 0.0
    %158 = vmatpush1.xpose.msra.mxu0 0.0
    %159 = vmatprep.subr.mxu0 0.0
    %160 = vmatpush1.xpose.msra.mxu0 0.0
    %161 = vmatprep.subr.mxu0 0.0
    %162 = vmatpush1.xpose.msra.mxu0 0.0
    %163 = vmatprep.subr.mxu0 0.0
    %164 = vmatpush1.xpose.msra.mxu0 0.0
    %165 = vmatprep.subr.mxu0 0.0
    %166 = vmatpush1.xpose.msra.mxu0 0.0
    %167 = vmatprep.subr.mxu0 0.0
    %168 = vmatpush1.xpose.msra.mxu0 0.0
    %169 = vmatprep.subr.mxu0 0.0
    %170 = vmatpush1.xpose.msra.mxu0 0.0
    %171 = vmatprep.subr.mxu0 0.0
    %172 = vmatpush1.xpose.msra.mxu0 0.0
    %173 = vmatprep.subr.mxu0 0.0
    %174 = vmatpush1.xpose.msra.mxu0 0.0
    %175 = vmatprep.subr.mxu0 0.0
    %176 = vmatpush1.xpose.msra.mxu0 0.0
    %177 = vmatprep.subr.mxu0 0.0
    %178 = vmatpush1.xpose.msra.mxu0 0.0
    %179 = vmatprep.subr.mxu0 0.0
    %180 = vmatpush1.xpose.msra.mxu0 0.0
    %181 = vmatprep.subr.mxu0 0.0
    %182 = vmatpush1.xpose.msra.mxu0 0.0
    %183 = vmatprep.subr.mxu0 0.0
    %184 = vmatpush1.xpose.msra.mxu0 0.0
    %185 = vmatprep.subr.mxu0 0.0
    %186 = vmatpush1.xpose.msra.mxu0 0.0
    %187 = vmatprep.subr.mxu0 0.0
    %188 = vmatpush1.xpose.msra.mxu0 0.0
    %189 = vmatprep.subr.mxu0 0.0
    %190 = vmatpush1.xpose.msra.mxu0 0.0
    %191 = vmatprep.subr.mxu0 0.0
    %192 = vmatpush1.xpose.msra.mxu0 0.0
    %193 = vmatprep.subr.mxu0 0.0
    %194 = vmatpush1.xpose.msra.mxu0 0.0
    %195 = vmatprep.subr.mxu0 0.0
    %196 = vmatpush1.xpose.msra.mxu0 0.0
    %197 = vmatprep.subr.mxu0 0.0
    %198 = vmatpush1.xpose.msra.mxu0 0.0
    %199 = vmatprep.subr.mxu0 0.0
    %200 = vmatpush1.xpose.msra.mxu0 0.0
    %201 = vmatprep.subr.mxu0 0.0
    %202 = vmatpush1.xpose.msra.mxu0 0.0
    %203 = vmatprep.subr.mxu0 0.0
    %204 = vmatpush1.xpose.msra.mxu0 0.0
    %205 = vmatprep.subr.mxu0 0.0
    %206 = vmatpush1.xpose.msra.mxu0 0.0
    %207 = vmatprep.mubr.f32.mxu0 0.0
    %208 = vmatmul.mubr.f32.gmra.mrb[0].mxu0 %v41
    %v209 = vpop.f32.mrb[0].mxu0
    %v210 = vadd.f32 0.0, %v209
    %v211 = vpop.f32.mrb[0].mxu0
    %212 = vmatprep.mubr.f32.mxu0 0.0
    %213 = vmatmul.mubr.f32.gmra.mrb[0].mxu0 %v42
    %v214 = vpop.f32.mrb[0].mxu0
    %v215 = vadd.f32 0.0, %v214
    %v216 = vpop.f32.mrb[0].mxu0
    %217 = vdwg.mxu0
    %v218 = vadd.f32 %v140, %v210
    %v219 = vadd.f32 %v141, %v215
    %vm220 = vcmask 31744
    %221 = vst.msk [vmem:[#allocation3] sm:$0xff] %vm220, %v218
    %222 = vst.msk [vmem:[#allocation3 + $0x8] sm:$0xff] %vm220, %v219
    // Predicated region
    $region26: #{tpu_custom_call.1} parent=1 // pred_check
      %p223 = pneg %p32
    $region27: #{tpu_custom_call.1} parent=1 // pred_check_branch
      %225 = sbr.rel (%p223) target = $region29
    $region28: #{tpu_custom_call.1} parent=1 // pred_region
      %v226 = vld [vmem:[#allocation3] sm:$0xff]
      %v227 = vld [vmem:[#allocation3 + $0x8] sm:$0xff]
      %v228 = vmul.f32 %v226, 0.25
      %v229 = vmul.f32 %v227, 0.25
      %v230 = vld [vmem:[%s3] sm:$0xff]
      %v231 = vld [vmem:[%s3 + $0x8] sm:$0xff]
      %v232 = vld [vmem:[%s3 + $0x10] sm:$0xff]
      %v233 = vld [vmem:[%s3 + $0x18] sm:$0xff]
      %v234 = vld [vmem:[%s3 + $0x20] sm:$0xff]
      %v235 = vld [vmem:[%s3 + $0x28] sm:$0xff]
      %v236 = vld [vmem:[%s3 + $0x30] sm:$0xff]
      %v237 = vld [vmem:[%s3 + $0x38] sm:$0xff]
      %v238 = vld [vmem:[%s3 + $0x40] sm:$0xff]
      %v239 = vld [vmem:[%s3 + $0x48] sm:$0xff]
      %v240 = vld [vmem:[%s3 + $0x50] sm:$0xff]
      %v241 = vld [vmem:[%s3 + $0x58] sm:$0xff]
      %v242 = vld [vmem:[%s3 + $0x60] sm:$0xff]
      %v243 = vld [vmem:[%s3 + $0x68] sm:$0xff]
      %v244 = vld [vmem:[%s3 + $0x70] sm:$0xff]
      %v245 = vld [vmem:[%s3 + $0x78] sm:$0xff]
      %v247 = vsel %vm220, %v228, 0
      %v250 = vsel %vm220, %v229, 0
      %v253 = vsel %vm220, %v230, 0
      %v256 = vsel %vm220, %v231, 0
      %v259 = vsel %vm220, %v232, 0
      %v262 = vsel %vm220, %v233, 0
      %v265 = vsel %vm220, %v234, 0
      %v268 = vsel %vm220, %v235, 0
      %v271 = vsel %vm220, %v236, 0
      %v274 = vsel %vm220, %v237, 0
      %v277 = vsel %vm220, %v238, 0
      %v280 = vsel %vm220, %v239, 0
      %v283 = vsel %vm220, %v240, 0
      %v286 = vsel %vm220, %v241, 0
      %v289 = vsel %vm220, %v242, 0
      %v292 = vsel %vm220, %v243, 0
      %v295 = vsel %vm220, %v244, 0
      %v298 = vsel %vm220, %v245, 0
      %300 = vmatprep.subr.mxu0 0.0
      %301 = vmatpush1.xpose.msra.mxu0 %v253
      %302 = vmatprep.subr.mxu0 0.0
      %303 = vmatpush1.xpose.msra.mxu0 %v256
      %304 = vmatprep.subr.mxu0 0.0
      %305 = vmatpush1.xpose.msra.mxu0 %v259
      %306 = vmatprep.subr.mxu0 0.0
      %307 = vmatpush1.xpose.msra.mxu0 %v262
      %308 = vmatprep.subr.mxu0 0.0
      %309 = vmatpush1.xpose.msra.mxu0 %v265
      %310 = vmatprep.subr.mxu0 0.0
      %311 = vmatpush1.xpose.msra.mxu0 %v268
      %312 = vmatprep.subr.mxu0 0.0
      %313 = vmatpush1.xpose.msra.mxu0 %v271
      %314 = vmatprep.subr.mxu0 0.0
      %315 = vmatpush1.xpose.msra.mxu0 %v274
      %316 = vmatprep.subr.mxu0 0.0
      %317 = vmatpush1.xpose.msra.mxu0 %v277
      %318 = vmatprep.subr.mxu0 0.0
      %319 = vmatpush1.xpose.msra.mxu0 %v280
      %320 = vmatprep.subr.mxu0 0.0
      %321 = vmatpush1.xpose.msra.mxu0 %v283
      %322 = vmatprep.subr.mxu0 0.0
      %323 = vmatpush1.xpose.msra.mxu0 %v286
      %324 = vmatprep.subr.mxu0 0.0
      %325 = vmatpush1.xpose.msra.mxu0 %v289
      %326 = vmatprep.subr.mxu0 0.0
      %327 = vmatpush1.xpose.msra.mxu0 %v292
      %328 = vmatprep.subr.mxu0 0.0
      %329 = vmatpush1.xpose.msra.mxu0 %v295
      %330 = vmatprep.subr.mxu0 0.0
      %331 = vmatpush1.xpose.msra.mxu0 %v298
      %332 = vmatprep.subr.mxu0 0.0
      %333 = vmatpush1.xpose.msra.mxu0 0.0
      %334 = vmatprep.subr.mxu0 0.0
      %335 = vmatpush1.xpose.msra.mxu0 0.0
      %336 = vmatprep.subr.mxu0 0.0
      %337 = vmatpush1.xpose.msra.mxu0 0.0
      %338 = vmatprep.subr.mxu0 0.0
      %339 = vmatpush1.xpose.msra.mxu0 0.0
      %340 = vmatprep.subr.mxu0 0.0
      %341 = vmatpush1.xpose.msra.mxu0 0.0
      %342 = vmatprep.subr.mxu0 0.0
      %343 = vmatpush1.xpose.msra.mxu0 0.0
      %344 = vmatprep.subr.mxu0 0.0
      %345 = vmatpush1.xpose.msra.mxu0 0.0
      %346 = vmatprep.subr.mxu0 0.0
      %347 = vmatpush1.xpose.msra.mxu0 0.0
      %348 = vmatprep.subr.mxu0 0.0
      %349 = vmatpush1.xpose.msra.mxu0 0.0
      %350 = vmatprep.subr.mxu0 0.0
      %351 = vmatpush1.xpose.msra.mxu0 0.0
      %352 = vmatprep.subr.mxu0 0.0
      %353 = vmatpush1.xpose.msra.mxu0 0.0
      %354 = vmatprep.subr.mxu0 0.0
      %355 = vmatpush1.xpose.msra.mxu0 0.0
      %356 = vmatprep.subr.mxu0 0.0
      %357 = vmatpush1.xpose.msra.mxu0 0.0
      %358 = vmatprep.subr.mxu0 0.0
      %359 = vmatpush1.xpose.msra.mxu0 0.0
      %360 = vmatprep.subr.mxu0 0.0
      %361 = vmatpush1.xpose.msra.mxu0 0.0
      %362 = vmatprep.subr.mxu0 0.0
      %363 = vmatpush1.xpose.msra.mxu0 0.0
      %364 = vmatprep.mubr.f32.mxu0 0.0
      %365 = vmatmul.mubr.f32.gmra.mrb[0].mxu0 %v247
      %v366 = vpop.f32.mrb[0].mxu0
      %v367 = vadd.f32 0.0, %v366
      %v368 = vpop.f32.mrb[0].mxu0
      %369 = vmatprep.mubr.f32.mxu0 0.0
      %370 = vmatmul.mubr.f32.gmra.mrb[0].mxu0 %v250
      %v371 = vpop.f32.mrb[0].mxu0
      %v372 = vadd.f32 0.0, %v371
      %v373 = vpop.f32.mrb[0].mxu0
      %374 = vdwg.mxu0
      %v375 = vld [vmem:[#allocation2] sm:$0xff]
      %v376 = vld [vmem:[#allocation2 + $0x8] sm:$0xff]
      %v377 = vadd.f32 %v375, %v367
      %v378 = vadd.f32 %v376, %v372
      %379 = vst [vmem:[#allocation7] sm:$0xff] %v377
      %380 = vst [vmem:[#allocation7 + $0x8] sm:$0xff] %v378
    $region29: #{tpu_custom_call.1} parent=1 // pred_fallthru
      _
    // Predicated region
    $region30: #{tpu_custom_call.1} parent=1 // pred_check
      _
    $region31: #{tpu_custom_call.1} parent=1 // pred_check_branch
      %382 = sbr.rel (0) target = $region33
    $region32: #{tpu_custom_call.1} parent=1 // pred_region
      %s384 = ssub.s32 256, 256
      %385 = vsyncadd [#allocation6], %s384
      %s386 = sshll.u32 [#allocation7], 4
      %s387 = int_to_ptr.vmem [resolvable:$true] %s386
      %392 = dma.vmem_to_hbm [thread:$0]  %s387, 256, %s4, [#allocation6], 128, 128, 8
    $region33: #{tpu_custom_call.1} parent=1 // pred_fallthru
      _
    // Predicated region
    $region34: #{tpu_custom_call.1} parent=1 // pred_check
      _
    $region35: #{tpu_custom_call.1} parent=1 // pred_check_branch
      %394 = sbr.rel (0) target = $region37
    $region36: #{tpu_custom_call.1} parent=1 // pred_region
      %395 = dma.done [#allocation6], 256
    $region37: #{tpu_custom_call.1} parent=1 // pred_fallthru
      _
    %396 = vsyncpa [#allocation5], 1
    %397 = vsyncpa [#allocation6], 1

</llo_original>
